<compile_context>
chip_gen: v7x
topology: tpu7x:2x2x1
jax: 0.10.0
libtpu: 0.0.40
codegen_flags: <defaults>
</compile_context>

<pallas_src>
import functools

import jax
import jax.numpy as jnp
from jax import lax
from jax.experimental import pallas as pl
from jax.experimental.pallas import tpu as pltpu

NUM_GROUPS = 16
GN_EPS = 1e-5
LRELU_SLOPE = 0.2


def _upconv_gn_lrelu_kernel(patches_ref, w_ref, b_ref, gamma_ref, beta_ref,
                            group_ref, out_ref):
    """One batch sample: (Cout,K)@(K,P) + bias -> GroupNorm(16) -> LeakyReLU(0.2).

    Output layout is (Cout, P) so the HBM-facing store is lane-dense.
    """
    pt = patches_ref[0]                                       # (K, P)    bf16
    w = w_ref[...]                                            # (Cout, K) bf16
    y = jnp.dot(w, pt, preferred_element_type=jnp.float32)    # (Cout, P) f32
    y = y + b_ref[...]                                        # bias (Cout, 1)

    cout, p = y.shape
    gsize = cout // NUM_GROUPS
    inv_cnt = 1.0 / float(p * gsize)

    # Per-channel first/second moments (cross-lane reductions), then fold channels
    # into their groups with a single matmul against the constant same-group matrix.
    ch_sum = jnp.sum(y, axis=1, keepdims=True)                # (Cout, 1)
    ch_sq = jnp.sum(y * y, axis=1, keepdims=True)             # (Cout, 1)
    ch_stats = jnp.concatenate([ch_sum, ch_sq], axis=1)       # (Cout, 2)
    mom = jnp.dot(group_ref[...], ch_stats,
                  preferred_element_type=jnp.float32) * inv_cnt   # (Cout, 2)

    mean_c = mom[:, 0:1]                                      # (Cout, 1)
    var_c = jnp.maximum(mom[:, 1:2] - mean_c * mean_c, 0.0)   # biased var, clamped
    inv_std = lax.rsqrt(var_c + GN_EPS)

    scale = gamma_ref[...] * inv_std                          # (Cout, 1)
    shift = beta_ref[...] - mean_c * scale
    yn = y * scale + shift
    out_ref[0] = jnp.maximum(yn, LRELU_SLOPE * yn)            # LeakyReLU(0.2)


def _upconv_patches(x, stride):
    """x: [N, Cin, H, W] -> patches [N, Cin*9, Hout*Wout] for the stride-1 conv
    equivalent of ConvTranspose2d(k=3, stride, padding=1, output_padding=stride-1)."""
    n, c, h, w = x.shape
    zero = jnp.zeros((), x.dtype)
    if stride == 2:
        # interior-dilate by 1; pad 1 on top/left, 1 + output_padding(=1) bottom/right
        xp = lax.pad(x, zero, ((0, 0, 0), (0, 0, 0), (1, 2, 1), (1, 2, 1)))
        hout, wout = 2 * h, 2 * w
    else:
        xp = lax.pad(x, zero, ((0, 0, 0), (0, 0, 0), (1, 1, 0), (1, 1, 0)))
        hout, wout = h, w
    cols = [xp[:, :, kh:kh + hout, kw:kw + wout]
            for kh in range(3) for kw in range(3)]
    patches = jnp.stack(cols, axis=2)                     # [N, C, 9, Hout, Wout]
    patches = patches.reshape(n, c * 9, hout * wout)      # [N, K, P] (ci-major, kh, kw)
    return patches, hout, wout


@functools.partial(jax.jit, static_argnames=("stride",))
def dcgan_upconv_forward(x, w, b, gamma, beta, *, stride):
    """x: [N, Cin, H, W] NCHW; w: ConvTranspose2d weight [Cin, Cout, 3, 3];
    b/gamma/beta: [Cout].  Returns NCHW [N, Cout, Hout, Wout]."""
    n, cin, _, _ = x.shape
    cout = w.shape[1]

    patches, hout, wout = _upconv_patches(x, stride)
    k_sz = cin * 9
    p_sz = hout * wout

    # ConvTranspose weight -> equivalent-conv weight matrix:
    # W_mat[co, (ci,kh,kw)] = W[ci, co, 2-kh, 2-kw]
    w_mat = jnp.transpose(jnp.flip(w, axis=(2, 3)), (1, 0, 2, 3)).reshape(cout, k_sz)

    # bf16 inputs to the MXU; accumulation + GroupNorm stay f32.
    patches = patches.astype(jnp.bfloat16)
    w_mat = w_mat.astype(jnp.bfloat16)

    b_col = b.reshape(cout, 1).astype(jnp.float32)
    gamma_col = gamma.reshape(cout, 1).astype(jnp.float32)
    beta_col = beta.reshape(cout, 1).astype(jnp.float32)

    # Constant same-group membership matrix (hoisted out of the kernel).
    gid = jnp.arange(cout) // (cout // NUM_GROUPS)
    group_mat = (gid[:, None] == gid[None, :]).astype(jnp.float32)   # (Cout, Cout)

    out = pl.pallas_call(
        _upconv_gn_lrelu_kernel,
        out_shape=jax.ShapeDtypeStruct((n, cout, p_sz), jnp.float32),
        grid=(n,),
        in_specs=[
            pl.BlockSpec((1, k_sz, p_sz), lambda i: (i, 0, 0)),
            pl.BlockSpec((cout, k_sz), lambda i: (0, 0)),
            pl.BlockSpec((cout, 1), lambda i: (0, 0)),
            pl.BlockSpec((cout, 1), lambda i: (0, 0)),
            pl.BlockSpec((cout, 1), lambda i: (0, 0)),
            pl.BlockSpec((cout, cout), lambda i: (0, 0)),
        ],
        out_specs=pl.BlockSpec((1, cout, p_sz), lambda i: (i, 0, 0)),
        compiler_params=pltpu.CompilerParams(dimension_semantics=("parallel",)),
    )(patches, w_mat, b_col, gamma_col, beta_col, group_mat)

    # [N, Cout, P] -> NCHW with a reshape only (no transpose).
    return out.reshape(n, cout, hout, wout)


def _reference(x, w, b, gamma, beta, stride):
    """Pure-JAX reference: ConvTranspose2d + GroupNorm(16) + LeakyReLU(0.2)."""
    op = 1 if stride == 2 else 0
    w_flip = jnp.transpose(jnp.flip(w, axis=(2, 3)), (1, 0, 2, 3))   # OIHW
    y = lax.conv_general_dilated(
        x, w_flip, window_strides=(1, 1),
        padding=((1, 1 + op), (1, 1 + op)),
        lhs_dilation=(stride, stride),
        dimension_numbers=("NCHW", "OIHW", "NCHW"))
    y = y + b.reshape(1, -1, 1, 1)
    n, c, h, wd = y.shape
    yg = y.reshape(n, NUM_GROUPS, c // NUM_GROUPS, h, wd)
    mean = yg.mean(axis=(2, 3, 4), keepdims=True)
    var = yg.var(axis=(2, 3, 4), keepdims=True)
    yn = ((yg - mean) * lax.rsqrt(var + GN_EPS)).reshape(n, c, h, wd)
    yn = yn * gamma.reshape(1, -1, 1, 1) + beta.reshape(1, -1, 1, 1)
    return jnp.where(yn >= 0, yn, LRELU_SLOPE * yn)


if __name__ == "__main__":
    key = jax.random.PRNGKey(0)
    k_x, k_w, k_b, k_g, k_be = jax.random.split(key, 5)

    # dcgan_upconv(nin=64, nout=32, stride=2): [2, 64, 8, 8] -> [2, 32, 16, 16]
    N, NIN, NOUT, H, W, STRIDE = 2, 64, 32, 8, 8, 2
    x = jax.random.normal(k_x, (N, NIN, H, W), jnp.float32)
    # ConvTranspose2d weight layout: [in_channels, out_channels, kH, kW]
    w = 0.05 * jax.random.normal(k_w, (NIN, NOUT, 3, 3), jnp.float32)
    b = 0.01 * jax.random.normal(k_b, (NOUT,), jnp.float32)
    gamma = 1.0 + 0.1 * jax.random.normal(k_g, (NOUT,), jnp.float32)
    beta = 0.1 * jax.random.normal(k_be, (NOUT,), jnp.float32)

    out = dcgan_upconv_forward(x, w, b, gamma, beta, stride=STRIDE)
    out = jax.block_until_ready(out)

    assert out.shape == (N, NOUT, STRIDE * H, STRIDE * W), out.shape
    assert bool(jnp.all(jnp.isfinite(out)))

    # Sanity check against a pure-JAX reference (tolerance covers bf16 MXU inputs).
    ref = _reference(x, w, b, gamma, beta, STRIDE)
    max_err = float(jnp.max(jnp.abs(out - ref)))
    assert max_err < 8e-2, max_err

    print("KERNEL_OK")
</pallas_src>

<mosaic_0001>
module attributes {stable_mosaic.version = 11 : i64} {
  func.func @_upconv_gn_lrelu_kernel(%arg0: i32, %arg1: memref<1x576x256xbf16, #tpu.memory_space<vmem>>, %arg2: memref<32x576xbf16, #tpu.memory_space<vmem>>, %arg3: memref<32x1xf32, #tpu.memory_space<vmem>>, %arg4: memref<32x1xf32, #tpu.memory_space<vmem>>, %arg5: memref<32x1xf32, #tpu.memory_space<vmem>>, %arg6: memref<32x32xf32, #tpu.memory_space<vmem>>, %arg7: memref<1x32x256xf32, #tpu.memory_space<vmem>>) attributes {dimension_semantics = [#tpu.dimension_semantics<parallel>], iteration_bounds = array<i64: 2>, scalar_prefetch = 0 : i64, scratch_operands = 0 : i64, tpu.core_type = #tpu.core_type<tc>, window_params = [{transform_indices = @transform_0, window_bounds = array<i64: 1, 576, 256>}, {pipeline_mode = #tpu.pipeline_mode<synchronous>, transform_indices = @transform_1, window_bounds = array<i64: 32, 576>}, {pipeline_mode = #tpu.pipeline_mode<synchronous>, transform_indices = @transform_2, window_bounds = array<i64: 32, 1>}, {pipeline_mode = #tpu.pipeline_mode<synchronous>, transform_indices = @transform_3, window_bounds = array<i64: 32, 1>}, {pipeline_mode = #tpu.pipeline_mode<synchronous>, transform_indices = @transform_4, window_bounds = array<i64: 32, 1>}, {pipeline_mode = #tpu.pipeline_mode<synchronous>, transform_indices = @transform_5, window_bounds = array<i64: 32, 32>}, {transform_indices = @transform_6, window_bounds = array<i64: 1, 32, 256>}]} {
    %c0 = arith.constant 0 : index
    %c0_0 = arith.constant 0 : index
    %c0_1 = arith.constant 0 : index
    %0 = vector.load %arg1[%c0, %c0_0, %c0_1] : memref<1x576x256xbf16, #tpu.memory_space<vmem>>, vector<1x576x256xbf16>
    %1 = vector.shape_cast %0 : vector<1x576x256xbf16> to vector<576x256xbf16>
    %c0_2 = arith.constant 0 : index
    %c0_3 = arith.constant 0 : index
    %2 = vector.load %arg2[%c0_2, %c0_3] : memref<32x576xbf16, #tpu.memory_space<vmem>>, vector<32x576xbf16>
    %cst = arith.constant dense<0.000000e+00> : vector<32x256xf32>
    %3 = tpu.matmul %2, %1, %cst {dimension_numbers = #tpu.dot_dimension_numbers<[1], [0], [0], [1], [0, 0, 1, 1], [], []>} : vector<32x576xbf16>, vector<576x256xbf16>, vector<32x256xf32> -> vector<32x256xf32>
    %c0_4 = arith.constant 0 : index
    %c0_5 = arith.constant 0 : index
    %4 = vector.load %arg3[%c0_4, %c0_5] : memref<32x1xf32, #tpu.memory_space<vmem>>, vector<32x1xf32>
    %5 = vector.broadcast %4 : vector<32x1xf32> to vector<32x256xf32>
    %6 = arith.addf %3, %5 : vector<32x256xf32>
    %cst_6 = arith.constant dense<0.000000e+00> : vector<32xf32>
    %7 = vector.multi_reduction <add>, %6, %cst_6 [1] : vector<32x256xf32> to vector<32xf32>
    %8 = vector.shape_cast %7 : vector<32xf32> to vector<32x1xf32>
    %9 = arith.mulf %6, %6 : vector<32x256xf32>
    %cst_7 = arith.constant dense<0.000000e+00> : vector<32xf32>
    %10 = vector.multi_reduction <add>, %9, %cst_7 [1] : vector<32x256xf32> to vector<32xf32>
    %11 = vector.shape_cast %10 : vector<32xf32> to vector<32x1xf32>
    %12 = tpu.concatenate %8, %11 in 1 : vector<32x1xf32>, vector<32x1xf32> -> vector<32x2xf32>
    %c0_8 = arith.constant 0 : index
    %c0_9 = arith.constant 0 : index
    %13 = vector.load %arg6[%c0_8, %c0_9] : memref<32x32xf32, #tpu.memory_space<vmem>>, vector<32x32xf32>
    %cst_10 = arith.constant dense<0.000000e+00> : vector<32x2xf32>
    %14 = tpu.matmul %13, %12, %cst_10 {dimension_numbers = #tpu.dot_dimension_numbers<[1], [0], [0], [1], [0, 0, 1, 1], [], []>} : vector<32x32xf32>, vector<32x2xf32>, vector<32x2xf32> -> vector<32x2xf32>
    %cst_11 = arith.constant 0.001953125 : f32
    %15 = vector.broadcast %cst_11 : f32 to vector<32x2xf32>
    %16 = arith.mulf %14, %15 : vector<32x2xf32>
    %17 = vector.extract_strided_slice %16 {offsets = [0, 0], sizes = [32, 1], strides = [1, 1]} : vector<32x2xf32> to vector<32x1xf32>
    %18 = vector.extract_strided_slice %16 {offsets = [0, 1], sizes = [32, 1], strides = [1, 1]} : vector<32x2xf32> to vector<32x1xf32>
    %19 = arith.mulf %17, %17 : vector<32x1xf32>
    %20 = arith.subf %18, %19 : vector<32x1xf32>
    %cst_12 = arith.constant 0.000000e+00 : f32
    %21 = vector.broadcast %cst_12 : f32 to vector<32x1xf32>
    %22 = arith.maximumf %20, %21 : vector<32x1xf32>
    %cst_13 = arith.constant 9.99999974E-6 : f32
    %23 = vector.broadcast %cst_13 : f32 to vector<32x1xf32>
    %24 = arith.addf %22, %23 : vector<32x1xf32>
    %25 = math.rsqrt %24 : vector<32x1xf32>
    %c0_14 = arith.constant 0 : index
    %c0_15 = arith.constant 0 : index
    %26 = vector.load %arg4[%c0_14, %c0_15] : memref<32x1xf32, #tpu.memory_space<vmem>>, vector<32x1xf32>
    %27 = arith.mulf %26, %25 : vector<32x1xf32>
    %c0_16 = arith.constant 0 : index
    %c0_17 = arith.constant 0 : index
    %28 = vector.load %arg5[%c0_16, %c0_17] : memref<32x1xf32, #tpu.memory_space<vmem>>, vector<32x1xf32>
    %29 = arith.mulf %17, %27 : vector<32x1xf32>
    %30 = arith.subf %28, %29 : vector<32x1xf32>
    %31 = vector.broadcast %27 : vector<32x1xf32> to vector<32x256xf32>
    %32 = arith.mulf %6, %31 : vector<32x256xf32>
    %33 = vector.broadcast %30 : vector<32x1xf32> to vector<32x256xf32>
    %34 = arith.addf %32, %33 : vector<32x256xf32>
    %cst_18 = arith.constant 2.000000e-01 : f32
    %35 = vector.broadcast %cst_18 : f32 to vector<32x256xf32>
    %36 = arith.mulf %35, %34 : vector<32x256xf32>
    %37 = arith.maximumf %34, %36 : vector<32x256xf32>
    %c0_19 = arith.constant 0 : index
    %c0_20 = arith.constant 0 : index
    %c0_21 = arith.constant 0 : index
    %38 = vector.load %arg7[%c0_19, %c0_20, %c0_21] : memref<1x32x256xf32, #tpu.memory_space<vmem>>, vector<1x32x256xf32>
    %39 = vector.shape_cast %38 : vector<1x32x256xf32> to vector<32x256xf32>
    %40 = vector.shape_cast %37 : vector<32x256xf32> to vector<1x32x256xf32>
    tpu.vector_store %arg7[%c0_19, %c0_20, %c0_21], %40 {strides = array<i32>} : memref<1x32x256xf32, #tpu.memory_space<vmem>>, vector<1x32x256xf32>,
    return
  }
  func.func @transform_0(%arg0: i32) -> (i32, i32, i32) {
    %c0_i32 = arith.constant 0 : i32
    %c0_i32_0 = arith.constant 0 : i32
    %c0_i32_1 = arith.constant 0 : i32
    return %arg0, %c0_i32, %c0_i32_0 : i32, i32, i32
  }
  func.func @transform_1(%arg0: i32) -> (i32, i32) {
    %c0_i32 = arith.constant 0 : i32
    %c0_i32_0 = arith.constant 0 : i32
    %c0_i32_1 = arith.constant 0 : i32
    return %c0_i32, %c0_i32_0 : i32, i32
  }
  func.func @transform_2(%arg0: i32) -> (i32, i32) {
    %c0_i32 = arith.constant 0 : i32
    %c0_i32_0 = arith.constant 0 : i32
    %c0_i32_1 = arith.constant 0 : i32
    return %c0_i32, %c0_i32_0 : i32, i32
  }
  func.func @transform_3(%arg0: i32) -> (i32, i32) {
    %c0_i32 = arith.constant 0 : i32
    %c0_i32_0 = arith.constant 0 : i32
    %c0_i32_1 = arith.constant 0 : i32
    return %c0_i32, %c0_i32_0 : i32, i32
  }
  func.func @transform_4(%arg0: i32) -> (i32, i32) {
    %c0_i32 = arith.constant 0 : i32
    %c0_i32_0 = arith.constant 0 : i32
    %c0_i32_1 = arith.constant 0 : i32
    return %c0_i32, %c0_i32_0 : i32, i32
  }
  func.func @transform_5(%arg0: i32) -> (i32, i32) {
    %c0_i32 = arith.constant 0 : i32
    %c0_i32_0 = arith.constant 0 : i32
    %c0_i32_1 = arith.constant 0 : i32
    return %c0_i32, %c0_i32_0 : i32, i32
  }
  func.func @transform_6(%arg0: i32) -> (i32, i32, i32) {
    %c0_i32 = arith.constant 0 : i32
    %c0_i32_0 = arith.constant 0 : i32
    %c0_i32_1 = arith.constant 0 : i32
    return %arg0, %c0_i32, %c0_i32_0 : i32, i32, i32
  }
}

</mosaic_0001>

<llo_original>
// kernel: dcgan_upconv_forward.1
$region0: #{dcgan_upconv_forward.1}
  #allocation0 [shape = 'u32[]', space=smem, size = 0x4, offset = 0x4, fixed_abs, tag = 'smem constant byte address 0x4 - core index']
  #allocation1 [shape = 'u32[144,128]{1,0:T(1,128)}', space=vmem, size = 0x12000, scoped, tag = 'internal scratch']
  %s0 = inlined_call_operand.vmem [shape: bf16[2,576,256], index: 0, kind: input, shape index: {}]
  %s1 = inlined_call_operand.vmem [shape: bf16[32,576], index: 1, kind: input, shape index: {}]
  %s2 = inlined_call_operand.vmem [shape: f32[32,1], index: 2, kind: input, shape index: {}]
  %s3 = inlined_call_operand.vmem [shape: f32[32,1], index: 3, kind: input, shape index: {}]
  %s4 = inlined_call_operand.vmem [shape: f32[32,1], index: 4, kind: input, shape index: {}]
  %s5 = inlined_call_operand.vmem [shape: f32[32,32], index: 5, kind: input, shape index: {}]
  %s6 = inlined_call_operand.vmem [shape: f32[2,32,256], index: 6, kind: output, shape index: {}]
  %s7 = sld [smem:[#allocation0]]
  $region57: #{dcgan_upconv_forward.1} parent=0
    _
  %s9 = ssub.s32 1, %s7
  %s10 = scalar_select 0, %s9, %s7
  loop: start=0, step=1, limit=4
  $region2: #{dcgan_upconv_forward.1} parent=0 // loop_pre_header
    _
  $region3: #{dcgan_upconv_forward.1} parent=0 // loop_header
    %s12 = sphi 0, %s16
    %p13 = scmp.ge.s32.totalorder %s12, 4
    %s22 = sphi 0, %s24
    %s25 = sphi 0, %s22
    %s26 = sphi 0, %s25
    %s42 = sphi 0, %s26
    %s46 = sphi 0, %s46
    %s48 = sphi 0, %s46
    %s49 = sphi 0, %s48
    %s63 = sphi 0, %s49
    %s67 = sphi 0, %s67
    %s69 = sphi 0, %s67
    %s70 = sphi 0, %s69
    %s84 = sphi 0, %s70
    %s88 = sphi 0, %s88
    %s90 = sphi 0, %s88
    %s91 = sphi 0, %s90
    %s105 = sphi 0, %s91
    %s109 = sphi 0, %s109
    %s111 = sphi 0, %s109
    %s112 = sphi 0, %s111
    %s126 = sphi 0, %s112
    %s130 = sphi 0, %s130
    %s132 = sphi 0, %s130
    %s133 = sphi 0, %s132
    %s147 = sphi 0, %s133
    %s153 = sphi 0, %s155
    %s156 = sphi 0, %s153
    %s157 = sphi 0, %s156
    %s173 = sphi 0, %s157
  $region4: #{dcgan_upconv_forward.1} parent=0 // loop_header_branch
    %15 = sbr.rel (%p13) target = $region8
  $region5: #{dcgan_upconv_forward.1} parent=0 // loop_body
    %s17 = ssub.s32 %s12, 1
    %s18 = ssub.s32 %s12, 2
    %s19 = sadd.s32 %s12, 1
    %s20 = ssub.s32 %s12, %s19
    %p21 = scmp.eq.s32.totalorder %s20, 0
    %s23 = sadd.s32 %s22, 1
    %s24 = scalar_select %p21, %s22, %s23
    %p27 = pneg %p21
    %p28 = scmp.eq.s32.totalorder %s12, 1
    %p29 = por %p27, %p28
    %p30 = scmp.ne.s32.totalorder %s22, %s25
    %p31 = scmp.eq.s32.totalorder %s12, 0
    %p32 = por %p30, %p31
    %p33 = scmp.ne.s32.totalorder %s22, %s25
    %p34 = scmp.eq.s32.totalorder %s17, 1
    %p35 = por %p33, %p34
    %p36 = scmp.ne.s32.totalorder %s25, %s26
    %p37 = scmp.eq.s32.totalorder %s17, 0
    %p38 = por %p36, %p37
    %p39 = scmp.ne.s32.totalorder %s25, %s26
    %p40 = scmp.eq.s32.totalorder %s18, 1
    %p41 = por %p39, %p40
    %p43 = scmp.ne.s32.totalorder %s26, %s42
    %p44 = scmp.eq.s32.totalorder %s18, 0
    %p45 = por %p43, %p44
    %s47 = sadd.s32 %s46, 1
    %p50 = scmp.eq.s32.totalorder %s12, 1
    %p51 = scmp.ne.s32.totalorder %s46, %s48
    %p52 = scmp.eq.s32.totalorder %s12, 0
    %p53 = por %p51, %p52
    %p54 = scmp.ne.s32.totalorder %s46, %s48
    %p55 = scmp.eq.s32.totalorder %s17, 1
    %p56 = por %p54, %p55
    %p57 = scmp.ne.s32.totalorder %s48, %s49
    %p58 = scmp.eq.s32.totalorder %s17, 0
    %p59 = por %p57, %p58
    %p60 = scmp.ne.s32.totalorder %s48, %s49
    %p61 = scmp.eq.s32.totalorder %s18, 1
    %p62 = por %p60, %p61
    %p64 = scmp.ne.s32.totalorder %s49, %s63
    %p65 = scmp.eq.s32.totalorder %s18, 0
    %p66 = por %p64, %p65
    %s68 = sadd.s32 %s67, 1
    %p71 = scmp.eq.s32.totalorder %s12, 1
    %p72 = scmp.ne.s32.totalorder %s67, %s69
    %p73 = scmp.eq.s32.totalorder %s12, 0
    %p74 = por %p72, %p73
    %p75 = scmp.ne.s32.totalorder %s67, %s69
    %p76 = scmp.eq.s32.totalorder %s17, 1
    %p77 = por %p75, %p76
    %p78 = scmp.ne.s32.totalorder %s69, %s70
    %p79 = scmp.eq.s32.totalorder %s17, 0
    %p80 = por %p78, %p79
    %p81 = scmp.ne.s32.totalorder %s69, %s70
    %p82 = scmp.eq.s32.totalorder %s18, 1
    %p83 = por %p81, %p82
    %p85 = scmp.ne.s32.totalorder %s70, %s84
    %p86 = scmp.eq.s32.totalorder %s18, 0
    %p87 = por %p85, %p86
    %s89 = sadd.s32 %s88, 1
    %p92 = scmp.eq.s32.totalorder %s12, 1
    %p93 = scmp.ne.s32.totalorder %s88, %s90
    %p94 = scmp.eq.s32.totalorder %s12, 0
    %p95 = por %p93, %p94
    %p96 = scmp.ne.s32.totalorder %s88, %s90
    %p97 = scmp.eq.s32.totalorder %s17, 1
    %p98 = por %p96, %p97
    %p99 = scmp.ne.s32.totalorder %s90, %s91
    %p100 = scmp.eq.s32.totalorder %s17, 0
    %p101 = por %p99, %p100
    %p102 = scmp.ne.s32.totalorder %s90, %s91
    %p103 = scmp.eq.s32.totalorder %s18, 1
    %p104 = por %p102, %p103
    %p106 = scmp.ne.s32.totalorder %s91, %s105
    %p107 = scmp.eq.s32.totalorder %s18, 0
    %p108 = por %p106, %p107
    %s110 = sadd.s32 %s109, 1
    %p113 = scmp.eq.s32.totalorder %s12, 1
    %p114 = scmp.ne.s32.totalorder %s109, %s111
    %p115 = scmp.eq.s32.totalorder %s12, 0
    %p116 = por %p114, %p115
    %p117 = scmp.ne.s32.totalorder %s109, %s111
    %p118 = scmp.eq.s32.totalorder %s17, 1
    %p119 = por %p117, %p118
    %p120 = scmp.ne.s32.totalorder %s111, %s112
    %p121 = scmp.eq.s32.totalorder %s17, 0
    %p122 = por %p120, %p121
    %p123 = scmp.ne.s32.totalorder %s111, %s112
    %p124 = scmp.eq.s32.totalorder %s18, 1
    %p125 = por %p123, %p124
    %p127 = scmp.ne.s32.totalorder %s112, %s126
    %p128 = scmp.eq.s32.totalorder %s18, 0
    %p129 = por %p127, %p128
    %s131 = sadd.s32 %s130, 1
    %p134 = scmp.eq.s32.totalorder %s12, 1
    %p135 = scmp.ne.s32.totalorder %s130, %s132
    %p136 = scmp.eq.s32.totalorder %s12, 0
    %p137 = por %p135, %p136
    %p138 = scmp.ne.s32.totalorder %s130, %s132
    %p139 = scmp.eq.s32.totalorder %s17, 1
    %p140 = por %p138, %p139
    %p141 = scmp.ne.s32.totalorder %s132, %s133
    %p142 = scmp.eq.s32.totalorder %s17, 0
    %p143 = por %p141, %p142
    %p144 = scmp.ne.s32.totalorder %s132, %s133
    %p145 = scmp.eq.s32.totalorder %s18, 1
    %p146 = por %p144, %p145
    %p148 = scmp.ne.s32.totalorder %s133, %s147
    %p149 = scmp.eq.s32.totalorder %s18, 0
    %p150 = por %p148, %p149
    %s151 = ssub.s32 %s12, %s19
    %p152 = scmp.eq.s32.totalorder %s151, 0
    %s154 = sadd.s32 %s153, 1
    %s155 = scalar_select %p152, %s153, %s154
    %p158 = pneg %p152
    %p159 = scmp.eq.s32.totalorder %s12, 1
    %p160 = por %p158, %p159
    %p161 = scmp.ne.s32.totalorder %s153, %s156
    %p162 = scmp.eq.s32.totalorder %s12, 0
    %p163 = por %p161, %p162
    %p164 = scmp.ne.s32.totalorder %s153, %s156
    %p165 = scmp.eq.s32.totalorder %s17, 1
    %p166 = por %p164, %p165
    %p167 = scmp.ne.s32.totalorder %s156, %s157
    %p168 = scmp.eq.s32.totalorder %s17, 0
    %p169 = por %p167, %p168
    %p170 = scmp.ne.s32.totalorder %s156, %s157
    %p171 = scmp.eq.s32.totalorder %s18, 1
    %p172 = por %p170, %p171
    %p174 = scmp.ne.s32.totalorder %s157, %s173
    %p175 = scmp.eq.s32.totalorder %s18, 0
    %p176 = por %p174, %p175
    %p177 = scmp.le.s32.totalorder 1, %s12
    %p178 = scmp.lt.s32.totalorder %s12, 3
    %p179 = pnand %p177, %p178
    %p180 = pneg %p179
    // Predicated region
    $region9: #{dcgan_upconv_forward.1} parent=5 // pred_check
      _
    $region10: #{dcgan_upconv_forward.1} parent=5 // pred_check_branch
      %182 = sbr.rel (%p179) target = $region12
    $region11: #{dcgan_upconv_forward.1} parent=5 // pred_region
      %s183 = ssub.s32 %s12, 1
      // Predicated region
      $region13: #{dcgan_upconv_forward.1} parent=11 // pred_check
        %p184 = pneg %p59
      $region14: #{dcgan_upconv_forward.1} parent=11 // pred_check_branch
        %186 = sbr.rel (%p184) target = $region16
      $region15: #{dcgan_upconv_forward.1} parent=11 // pred_region
        _
      $region16: #{dcgan_upconv_forward.1} parent=11 // pred_fallthru
        _
      // Predicated region
      $region17: #{dcgan_upconv_forward.1} parent=11 // pred_check
        %p187 = pneg %p80
      $region18: #{dcgan_upconv_forward.1} parent=11 // pred_check_branch
        %189 = sbr.rel (%p187) target = $region20
      $region19: #{dcgan_upconv_forward.1} parent=11 // pred_region
        _
      $region20: #{dcgan_upconv_forward.1} parent=11 // pred_fallthru
        _
      // Predicated region
      $region21: #{dcgan_upconv_forward.1} parent=11 // pred_check
        %p190 = pneg %p101
      $region22: #{dcgan_upconv_forward.1} parent=11 // pred_check_branch
        %192 = sbr.rel (%p190) target = $region24
      $region23: #{dcgan_upconv_forward.1} parent=11 // pred_region
        _
      $region24: #{dcgan_upconv_forward.1} parent=11 // pred_fallthru
        _
      // Predicated region
      $region25: #{dcgan_upconv_forward.1} parent=11 // pred_check
        %p193 = pneg %p122
      $region26: #{dcgan_upconv_forward.1} parent=11 // pred_check_branch
        %195 = sbr.rel (%p193) target = $region28
      $region27: #{dcgan_upconv_forward.1} parent=11 // pred_region
        _
      $region28: #{dcgan_upconv_forward.1} parent=11 // pred_fallthru
        _
      // Predicated region
      $region29: #{dcgan_upconv_forward.1} parent=11 // pred_check
        %p196 = pneg %p143
      $region30: #{dcgan_upconv_forward.1} parent=11 // pred_check_branch
        %198 = sbr.rel (%p196) target = $region32
      $region31: #{dcgan_upconv_forward.1} parent=11 // pred_region
        _
      $region32: #{dcgan_upconv_forward.1} parent=11 // pred_fallthru
        _
    $region12: #{dcgan_upconv_forward.1} parent=5 // pred_fallthru
      _
    %p199 = scmp.lt.s32.totalorder %s12, 2
    // Predicated region
    $region33: #{dcgan_upconv_forward.1} parent=5 // pred_check
      %p200 = pneg %p199
    $region34: #{dcgan_upconv_forward.1} parent=5 // pred_check_branch
      %202 = sbr.rel (%p200) target = $region36
    $region35: #{dcgan_upconv_forward.1} parent=5 // pred_region
      // Predicated region
      $region37: #{dcgan_upconv_forward.1} parent=35 // pred_check
        %p203 = pneg %p32
      $region38: #{dcgan_upconv_forward.1} parent=35 // pred_check_branch
        %205 = sbr.rel (%p203) target = $region40
      $region39: #{dcgan_upconv_forward.1} parent=35 // pred_region
        %p206 = scmp.lt.s32.totalorder %s12, 1
        %s207 = scalar_select %p206, %s12, 1
        %s208 = smul.addr %s207, 144
        %s209 = smul.addr %s208, 4
        %s210 = scalar_lea.vmem %s0, %s209
      $region40: #{dcgan_upconv_forward.1} parent=35 // pred_fallthru
        _
    $region36: #{dcgan_upconv_forward.1} parent=5 // pred_fallthru
      _
    %p211 = scmp.le.s32.totalorder 1, %s12
    %p212 = scmp.lt.s32.totalorder %s12, 3
    %p213 = pnand %p211, %p212
    %p214 = pneg %p213
    // Predicated region
    $region41: #{dcgan_upconv_forward.1} parent=5 // pred_check
      _
    $region42: #{dcgan_upconv_forward.1} parent=5 // pred_check_branch
      %216 = sbr.rel (%p213) target = $region44
    $region43: #{dcgan_upconv_forward.1} parent=5 // pred_region
      %s217 = ssub.s32 %s12, 1
      %p218 = scmp.lt.s32.totalorder %s17, 1
      %s219 = scalar_select %p218, %s17, 1
      %s220 = smul.addr %s219, 144
      %s221 = smul.addr %s220, 4
      %s222 = scalar_lea.vmem %s0, %s221
      %p223 = pneg %p38
      %p224 = pneg %p35
      %p225 = pneg %p59
      %p226 = pneg %p56
      %p227 = pneg %p80
      %p228 = pneg %p77
      %p229 = pneg %p101
      %p230 = pneg %p98
      %p231 = pneg %p122
      %p232 = pneg %p119
      %p233 = pneg %p143
      %p234 = pneg %p140
      %p235 = pneg %p169
      %p236 = pneg %p166
      %p237 = scmp.lt.s32.totalorder %s17, 1
      %s238 = scalar_select %p237, %s17, 1
      %s239 = smul.addr %s238, 8
      %s240 = smul.addr %s239, 8
      %s241 = scalar_lea.vmem %s6, %s240
      %p242 = scmp.lt.s32.totalorder %s17, 1
      %s243 = scalar_select %p242, %s17, 1
      %s244 = smul.addr %s243, 144
      %s245 = smul.addr %s244, 4
      %s246 = scalar_lea.vmem %s0, %s245
      %p247 = scmp.lt.s32.totalorder %s17, 1
      %s248 = scalar_select %p247, %s17, 1
      %s249 = smul.addr %s248, 8
      %s250 = smul.addr %s249, 8
      %s251 = scalar_lea.vmem %s6, %s250
      %v253 = vld [vmem:[%s246] sm:$0xff]
      %v254 = vld [vmem:[%s246 + $0x8] sm:$0xff]
      %v255 = vld [vmem:[%s246 + $0x10] sm:$0xff]
      %v256 = vld [vmem:[%s246 + $0x18] sm:$0xff]
      %v257 = vld [vmem:[%s246 + $0x20] sm:$0xff]
      %v258 = vld [vmem:[%s246 + $0x28] sm:$0xff]
      %v259 = vld [vmem:[%s246 + $0x30] sm:$0xff]
      %v260 = vld [vmem:[%s246 + $0x38] sm:$0xff]
      %v261 = vld [vmem:[%s246 + $0x40] sm:$0xff]
      %v262 = vld [vmem:[%s246 + $0x48] sm:$0xff]
      %v263 = vld [vmem:[%s246 + $0x50] sm:$0xff]
      %v264 = vld [vmem:[%s246 + $0x58] sm:$0xff]
      %v265 = vld [vmem:[%s246 + $0x60] sm:$0xff]
      %v266 = vld [vmem:[%s246 + $0x68] sm:$0xff]
      %v267 = vld [vmem:[%s246 + $0x70] sm:$0xff]
      %v268 = vld [vmem:[%s246 + $0x78] sm:$0xff]
      %v269 = vld [vmem:[%s246 + $0x80] sm:$0xff]
      %v270 = vld [vmem:[%s246 + $0x88] sm:$0xff]
      %v271 = vld [vmem:[%s246 + $0x90] sm:$0xff]
      %v272 = vld [vmem:[%s246 + $0x98] sm:$0xff]
      %v273 = vld [vmem:[%s246 + $0xa0] sm:$0xff]
      %v274 = vld [vmem:[%s246 + $0xa8] sm:$0xff]
      %v275 = vld [vmem:[%s246 + $0xb0] sm:$0xff]
      %v276 = vld [vmem:[%s246 + $0xb8] sm:$0xff]
      %v277 = vld [vmem:[%s246 + $0xc0] sm:$0xff]
      %v278 = vld [vmem:[%s246 + $0xc8] sm:$0xff]
      %v279 = vld [vmem:[%s246 + $0xd0] sm:$0xff]
      %v280 = vld [vmem:[%s246 + $0xd8] sm:$0xff]
      %v281 = vld [vmem:[%s246 + $0xe0] sm:$0xff]
      %v282 = vld [vmem:[%s246 + $0xe8] sm:$0xff]
      %v283 = vld [vmem:[%s246 + $0xf0] sm:$0xff]
      %v284 = vld [vmem:[%s246 + $0xf8] sm:$0xff]
      %v285 = vld [vmem:[%s246 + $0x100] sm:$0xff]
      %v286 = vld [vmem:[%s246 + $0x108] sm:$0xff]
      %v287 = vld [vmem:[%s246 + $0x110] sm:$0xff]
      %v288 = vld [vmem:[%s246 + $0x118] sm:$0xff]
      %v289 = vld [vmem:[%s246 + $0x120] sm:$0xff]
      %v290 = vld [vmem:[%s246 + $0x128] sm:$0xff]
      %v291 = vld [vmem:[%s246 + $0x130] sm:$0xff]
      %v292 = vld [vmem:[%s246 + $0x138] sm:$0xff]
      %v293 = vld [vmem:[%s246 + $0x140] sm:$0xff]
      %v294 = vld [vmem:[%s246 + $0x148] sm:$0xff]
      %v295 = vld [vmem:[%s246 + $0x150] sm:$0xff]
      %v296 = vld [vmem:[%s246 + $0x158] sm:$0xff]
      %v297 = vld [vmem:[%s246 + $0x160] sm:$0xff]
      %v298 = vld [vmem:[%s246 + $0x168] sm:$0xff]
      %v299 = vld [vmem:[%s246 + $0x170] sm:$0xff]
      %v300 = vld [vmem:[%s246 + $0x178] sm:$0xff]
      %v301 = vld [vmem:[%s246 + $0x180] sm:$0xff]
      %v302 = vld [vmem:[%s246 + $0x188] sm:$0xff]
      %v303 = vld [vmem:[%s246 + $0x190] sm:$0xff]
      %v304 = vld [vmem:[%s246 + $0x198] sm:$0xff]
      %v305 = vld [vmem:[%s246 + $0x1a0] sm:$0xff]
      %v306 = vld [vmem:[%s246 + $0x1a8] sm:$0xff]
      %v307 = vld [vmem:[%s246 + $0x1b0] sm:$0xff]
      %v308 = vld [vmem:[%s246 + $0x1b8] sm:$0xff]
      %v309 = vld [vmem:[%s246 + $0x1c0] sm:$0xff]
      %v310 = vld [vmem:[%s246 + $0x1c8] sm:$0xff]
      %v311 = vld [vmem:[%s246 + $0x1d0] sm:$0xff]
      %v312 = vld [vmem:[%s246 + $0x1d8] sm:$0xff]
      %v313 = vld [vmem:[%s246 + $0x1e0] sm:$0xff]
      %v314 = vld [vmem:[%s246 + $0x1e8] sm:$0xff]
      %v315 = vld [vmem:[%s246 + $0x1f0] sm:$0xff]
      %v316 = vld [vmem:[%s246 + $0x1f8] sm:$0xff]
      %v317 = vld [vmem:[%s246 + $0x200] sm:$0xff]
      %v318 = vld [vmem:[%s246 + $0x208] sm:$0xff]
      %v319 = vld [vmem:[%s246 + $0x210] sm:$0xff]
      %v320 = vld [vmem:[%s246 + $0x218] sm:$0xff]
      %v321 = vld [vmem:[%s246 + $0x220] sm:$0xff]
      %v322 = vld [vmem:[%s246 + $0x228] sm:$0xff]
      %v323 = vld [vmem:[%s246 + $0x230] sm:$0xff]
      %v324 = vld [vmem:[%s246 + $0x238] sm:$0xff]
      %v325 = vld [vmem:[%s1] sm:$0xff]
      %v326 = vld [vmem:[%s1 + $0x8] sm:$0xff]
      %v327 = vld [vmem:[%s1 + $0x10] sm:$0xf]
      %v328 = vld [vmem:[%s1 + $0x14] sm:$0xff]
      %v329 = vld [vmem:[%s1 + $0x1c] sm:$0xff]
      %v330 = vld [vmem:[%s1 + $0x24] sm:$0xf]
      %v331 = vld [vmem:[%s1 + $0x28] sm:$0xff]
      %v332 = vld [vmem:[%s1 + $0x30] sm:$0xff]
      %v333 = vld [vmem:[%s1 + $0x38] sm:$0xf]
      %v334 = vld [vmem:[%s1 + $0x3c] sm:$0xff]
      %v335 = vld [vmem:[%s1 + $0x44] sm:$0xff]
      %v336 = vld [vmem:[%s1 + $0x4c] sm:$0xf]
      %v337 = vld [vmem:[%s2] sm:$0xff]
      %v338 = vld [vmem:[%s2 + $0x8] sm:$0xff]
      %v339 = vld [vmem:[%s2 + $0x10] sm:$0xff]
      %v340 = vld [vmem:[%s2 + $0x18] sm:$0xff]
      %342 = vset.pattern.permute.xlu0 0
      %343 = vperm.xlu0 %342, %v337
      %v344 = vpop.permute.xlu0 %343
      %347 = vset.pattern.permute.xlu0 0
      %348 = vperm.xlu0 %347, %v338
      %v349 = vpop.permute.xlu0 %348
      %352 = vset.pattern.permute.xlu0 0
      %353 = vperm.xlu0 %352, %v339
      %v354 = vpop.permute.xlu0 %353
      %357 = vset.pattern.permute.xlu0 0
      %358 = vperm.xlu0 %357, %v340
      %v359 = vpop.permute.xlu0 %358
      %v373 = vunpack.c.l.b16 %v325
      %v374 = vunpack.c.h.b16 %v325
      %v375 = vunpack.c.l.b16 %v326
      %v376 = vunpack.c.h.b16 %v326
      %v377 = vunpack.c.l.b16 %v327
      %v378 = vunpack.c.l.b16 %v328
      %v379 = vunpack.c.h.b16 %v328
      %v380 = vunpack.c.l.b16 %v329
      %v381 = vunpack.c.h.b16 %v329
      %v382 = vunpack.c.l.b16 %v330
      %v383 = vunpack.c.l.b16 %v331
      %v384 = vunpack.c.h.b16 %v331
      %v385 = vunpack.c.l.b16 %v332
      %v386 = vunpack.c.h.b16 %v332
      %v387 = vunpack.c.l.b16 %v333
      %v388 = vunpack.c.l.b16 %v334
      %v389 = vunpack.c.h.b16 %v334
      %v390 = vunpack.c.l.b16 %v335
      %v391 = vunpack.c.h.b16 %v335
      %v392 = vunpack.c.l.b16 %v336
      %v393 = vpack.c.b16 %v378, %v373
      %v394 = vpack.c.b16 %v379, %v374
      %v395 = vpack.c.b16 %v380, %v375
      %v396 = vpack.c.b16 %v381, %v376
      %v397 = vpack.c.b16 %v382, %v377
      %v398 = vpack.c.b16 %v388, %v383
      %v399 = vpack.c.b16 %v389, %v384
      %v400 = vpack.c.b16 %v390, %v385
      %v401 = vpack.c.b16 %v391, %v386
      %v402 = vpack.c.b16 %v392, %v387
      %v483 = vunpack.c.l.b16 %v253
      %v484 = vunpack.c.h.b16 %v253
      %v485 = vunpack.c.l.b16 %v254
      %v486 = vunpack.c.h.b16 %v254
      %v487 = vunpack.c.l.b16 %v255
      %v488 = vunpack.c.h.b16 %v255
      %v489 = vunpack.c.l.b16 %v256
      %v490 = vunpack.c.h.b16 %v256
      %v491 = vunpack.c.l.b16 %v257
      %v492 = vunpack.c.h.b16 %v257
      %v493 = vunpack.c.l.b16 %v258
      %v494 = vunpack.c.h.b16 %v258
      %v495 = vunpack.c.l.b16 %v259
      %v496 = vunpack.c.h.b16 %v259
      %v497 = vunpack.c.l.b16 %v260
      %v498 = vunpack.c.h.b16 %v260
      %v499 = vunpack.c.l.b16 %v261
      %v500 = vunpack.c.h.b16 %v261
      %v501 = vunpack.c.l.b16 %v262
      %v502 = vunpack.c.h.b16 %v262
      %v503 = vunpack.c.l.b16 %v263
      %v504 = vunpack.c.h.b16 %v263
      %v505 = vunpack.c.l.b16 %v264
      %v506 = vunpack.c.h.b16 %v264
      %v507 = vunpack.c.l.b16 %v265
      %v508 = vunpack.c.h.b16 %v265
      %v509 = vunpack.c.l.b16 %v266
      %v510 = vunpack.c.h.b16 %v266
      %v511 = vunpack.c.l.b16 %v267
      %v512 = vunpack.c.h.b16 %v267
      %v513 = vunpack.c.l.b16 %v268
      %v514 = vunpack.c.h.b16 %v268
      %v515 = vunpack.c.l.b16 %v269
      %v516 = vunpack.c.h.b16 %v269
      %v517 = vunpack.c.l.b16 %v270
      %v518 = vunpack.c.h.b16 %v270
      %v519 = vunpack.c.l.b16 %v271
      %v520 = vunpack.c.h.b16 %v271
      %v521 = vunpack.c.l.b16 %v272
      %v522 = vunpack.c.h.b16 %v272
      %v523 = vunpack.c.l.b16 %v273
      %v524 = vunpack.c.h.b16 %v273
      %v525 = vunpack.c.l.b16 %v274
      %v526 = vunpack.c.h.b16 %v274
      %v527 = vunpack.c.l.b16 %v275
      %v528 = vunpack.c.h.b16 %v275
      %v529 = vunpack.c.l.b16 %v276
      %v530 = vunpack.c.h.b16 %v276
      %v531 = vunpack.c.l.b16 %v277
      %v532 = vunpack.c.h.b16 %v277
      %v533 = vunpack.c.l.b16 %v278
      %v534 = vunpack.c.h.b16 %v278
      %v535 = vunpack.c.l.b16 %v279
      %v536 = vunpack.c.h.b16 %v279
      %v537 = vunpack.c.l.b16 %v280
      %v538 = vunpack.c.h.b16 %v280
      %v539 = vunpack.c.l.b16 %v281
      %v540 = vunpack.c.h.b16 %v281
      %v541 = vunpack.c.l.b16 %v282
      %v542 = vunpack.c.h.b16 %v282
      %v543 = vunpack.c.l.b16 %v283
      %v544 = vunpack.c.h.b16 %v283
      %v545 = vunpack.c.l.b16 %v284
      %v546 = vunpack.c.h.b16 %v284
      %v547 = vunpack.c.l.b16 %v285
      %v548 = vunpack.c.h.b16 %v285
      %v549 = vunpack.c.l.b16 %v286
      %v550 = vunpack.c.h.b16 %v286
      %v551 = vunpack.c.l.b16 %v287
      %v552 = vunpack.c.h.b16 %v287
      %v553 = vunpack.c.l.b16 %v288
      %v554 = vunpack.c.h.b16 %v288
      %v555 = vunpack.c.l.b16 %v289
      %v556 = vunpack.c.h.b16 %v289
      %v557 = vunpack.c.l.b16 %v290
      %v558 = vunpack.c.h.b16 %v290
      %v559 = vunpack.c.l.b16 %v291
      %v560 = vunpack.c.h.b16 %v291
      %v561 = vunpack.c.l.b16 %v292
      %v562 = vunpack.c.h.b16 %v292
      %v563 = vunpack.c.l.b16 %v293
      %v564 = vunpack.c.h.b16 %v293
      %v565 = vunpack.c.l.b16 %v294
      %v566 = vunpack.c.h.b16 %v294
      %v567 = vunpack.c.l.b16 %v295
      %v568 = vunpack.c.h.b16 %v295
      %v569 = vunpack.c.l.b16 %v296
      %v570 = vunpack.c.h.b16 %v296
      %v571 = vunpack.c.l.b16 %v297
      %v572 = vunpack.c.h.b16 %v297
      %v573 = vunpack.c.l.b16 %v298
      %v574 = vunpack.c.h.b16 %v298
      %v575 = vunpack.c.l.b16 %v299
      %v576 = vunpack.c.h.b16 %v299
      %v577 = vunpack.c.l.b16 %v300
      %v578 = vunpack.c.h.b16 %v300
      %v579 = vunpack.c.l.b16 %v301
      %v580 = vunpack.c.h.b16 %v301
      %v581 = vunpack.c.l.b16 %v302
      %v582 = vunpack.c.h.b16 %v302
      %v583 = vunpack.c.l.b16 %v303
      %v584 = vunpack.c.h.b16 %v303
      %v585 = vunpack.c.l.b16 %v304
      %v586 = vunpack.c.h.b16 %v304
      %v587 = vunpack.c.l.b16 %v305
      %v588 = vunpack.c.h.b16 %v305
      %v589 = vunpack.c.l.b16 %v306
      %v590 = vunpack.c.h.b16 %v306
      %v591 = vunpack.c.l.b16 %v307
      %v592 = vunpack.c.h.b16 %v307
      %v593 = vunpack.c.l.b16 %v308
      %v594 = vunpack.c.h.b16 %v308
      %v595 = vunpack.c.l.b16 %v309
      %v596 = vunpack.c.h.b16 %v309
      %v597 = vunpack.c.l.b16 %v310
      %v598 = vunpack.c.h.b16 %v310
      %v599 = vunpack.c.l.b16 %v311
      %v600 = vunpack.c.h.b16 %v311
      %v601 = vunpack.c.l.b16 %v312
      %v602 = vunpack.c.h.b16 %v312
      %v603 = vunpack.c.l.b16 %v313
      %v604 = vunpack.c.h.b16 %v313
      %v605 = vunpack.c.l.b16 %v314
      %v606 = vunpack.c.h.b16 %v314
      %v607 = vunpack.c.l.b16 %v315
      %v608 = vunpack.c.h.b16 %v315
      %v609 = vunpack.c.l.b16 %v316
      %v610 = vunpack.c.h.b16 %v316
      %v611 = vunpack.c.l.b16 %v317
      %v612 = vunpack.c.h.b16 %v317
      %v613 = vunpack.c.l.b16 %v318
      %v614 = vunpack.c.h.b16 %v318
      %v615 = vunpack.c.l.b16 %v319
      %v616 = vunpack.c.h.b16 %v319
      %v617 = vunpack.c.l.b16 %v320
      %v618 = vunpack.c.h.b16 %v320
      %v619 = vunpack.c.l.b16 %v321
      %v620 = vunpack.c.h.b16 %v321
      %v621 = vunpack.c.l.b16 %v322
      %v622 = vunpack.c.h.b16 %v322
      %v623 = vunpack.c.l.b16 %v323
      %v624 = vunpack.c.h.b16 %v323
      %v625 = vunpack.c.l.b16 %v324
      %v626 = vunpack.c.h.b16 %v324
      %v627 = vpack.c.b16 %v485, %v483
      %v628 = vpack.c.b16 %v486, %v484
      %v629 = vpack.c.b16 %v489, %v487
      %v630 = vpack.c.b16 %v490, %v488
      %v631 = vpack.c.b16 %v493, %v491
      %v632 = vpack.c.b16 %v494, %v492
      %v633 = vpack.c.b16 %v497, %v495
      %v634 = vpack.c.b16 %v498, %v496
      %v635 = vpack.c.b16 %v501, %v499
      %v636 = vpack.c.b16 %v502, %v500
      %v637 = vpack.c.b16 %v505, %v503
      %v638 = vpack.c.b16 %v506, %v504
      %v639 = vpack.c.b16 %v509, %v507
      %v640 = vpack.c.b16 %v510, %v508
      %v641 = vpack.c.b16 %v513, %v511
      %v642 = vpack.c.b16 %v514, %v512
      %v643 = vpack.c.b16 %v517, %v515
      %v644 = vpack.c.b16 %v518, %v516
      %v645 = vpack.c.b16 %v521, %v519
      %v646 = vpack.c.b16 %v522, %v520
      %v647 = vpack.c.b16 %v525, %v523
      %v648 = vpack.c.b16 %v526, %v524
      %v649 = vpack.c.b16 %v529, %v527
      %v650 = vpack.c.b16 %v530, %v528
      %v651 = vpack.c.b16 %v533, %v531
      %v652 = vpack.c.b16 %v534, %v532
      %v653 = vpack.c.b16 %v537, %v535
      %v654 = vpack.c.b16 %v538, %v536
      %v655 = vpack.c.b16 %v541, %v539
      %v656 = vpack.c.b16 %v542, %v540
      %v657 = vpack.c.b16 %v545, %v543
      %v658 = vpack.c.b16 %v546, %v544
      %v659 = vpack.c.b16 %v549, %v547
      %v660 = vpack.c.b16 %v550, %v548
      %v661 = vpack.c.b16 %v553, %v551
      %v662 = vpack.c.b16 %v554, %v552
      %v663 = vpack.c.b16 %v557, %v555
      %v664 = vpack.c.b16 %v558, %v556
      %v665 = vpack.c.b16 %v561, %v559
      %v666 = vpack.c.b16 %v562, %v560
      %v667 = vpack.c.b16 %v565, %v563
      %v668 = vpack.c.b16 %v566, %v564
      %v669 = vpack.c.b16 %v569, %v567
      %v670 = vpack.c.b16 %v570, %v568
      %v671 = vpack.c.b16 %v573, %v571
      %v672 = vpack.c.b16 %v574, %v572
      %v673 = vpack.c.b16 %v577, %v575
      %v674 = vpack.c.b16 %v578, %v576
      %v675 = vpack.c.b16 %v581, %v579
      %v676 = vpack.c.b16 %v582, %v580
      %v677 = vpack.c.b16 %v585, %v583
      %v678 = vpack.c.b16 %v586, %v584
      %v679 = vpack.c.b16 %v589, %v587
      %v680 = vpack.c.b16 %v590, %v588
      %v681 = vpack.c.b16 %v593, %v591
      %v682 = vpack.c.b16 %v594, %v592
      %v683 = vpack.c.b16 %v597, %v595
      %v684 = vpack.c.b16 %v598, %v596
      %v685 = vpack.c.b16 %v601, %v599
      %v686 = vpack.c.b16 %v602, %v600
      %v687 = vpack.c.b16 %v605, %v603
      %v688 = vpack.c.b16 %v606, %v604
      %v689 = vpack.c.b16 %v609, %v607
      %v690 = vpack.c.b16 %v610, %v608
      %v691 = vpack.c.b16 %v613, %v611
      %v692 = vpack.c.b16 %v614, %v612
      %v693 = vpack.c.b16 %v617, %v615
      %v694 = vpack.c.b16 %v618, %v616
      %v695 = vpack.c.b16 %v621, %v619
      %v696 = vpack.c.b16 %v622, %v620
      %v697 = vpack.c.b16 %v625, %v623
      %v698 = vpack.c.b16 %v626, %v624
      %vm771 = vcmask 523264
      %v773 = vsel %vm771, %v397, 0
      %v776 = vsel %vm771, %v402, 0
      %778 = vmatprep.subr.bf16.mxu0 %v628
      %779 = vmatpush1.bf16.msra.mxu0 %v627
      %780 = vmatprep.subr.bf16.mxu0 %v630
      %781 = vmatpush1.bf16.msra.mxu0 %v629
      %782 = vmatprep.subr.bf16.mxu0 %v632
      %783 = vmatpush1.bf16.msra.mxu0 %v631
      %784 = vmatprep.subr.bf16.mxu0 %v634
      %785 = vmatpush1.bf16.msra.mxu0 %v633
      %786 = vmatprep.subr.bf16.mxu0 %v636
      %787 = vmatpush1.bf16.msra.mxu0 %v635
      %788 = vmatprep.subr.bf16.mxu0 %v638
      %789 = vmatpush1.bf16.msra.mxu0 %v637
      %790 = vmatprep.subr.bf16.mxu0 %v640
      %791 = vmatpush1.bf16.msra.mxu0 %v639
      %792 = vmatprep.subr.bf16.mxu0 %v642
      %793 = vmatpush1.bf16.msra.mxu0 %v641
      %794 = vmatprep.subr.bf16.mxu0 %v644
      %795 = vmatpush1.bf16.msra.mxu0 %v643
      %796 = vmatprep.subr.bf16.mxu0 %v646
      %797 = vmatpush1.bf16.msra.mxu0 %v645
      %798 = vmatprep.subr.bf16.mxu0 %v648
      %799 = vmatpush1.bf16.msra.mxu0 %v647
      %800 = vmatprep.subr.bf16.mxu0 %v650
      %801 = vmatpush1.bf16.msra.mxu0 %v649
      %802 = vmatprep.subr.bf16.mxu0 %v652
      %803 = vmatpush1.bf16.msra.mxu0 %v651
      %804 = vmatprep.subr.bf16.mxu0 %v654
      %805 = vmatpush1.bf16.msra.mxu0 %v653
      %806 = vmatprep.subr.bf16.mxu0 %v656
      %807 = vmatpush1.bf16.msra.mxu0 %v655
      %808 = vmatprep.subr.bf16.mxu0 %v658
      %809 = vmatpush1.bf16.msra.mxu0 %v657
      %810 = vmatprep.mubr.bf16.mxu0 %v394
      %811 = vmatmul.mubr.bf16.gmra.mrb[0].mxu0 %v393
      %v812 = vpop.f32.mrb[0].mxu0
      %v813 = vadd.f32 %v344, %v812
      %v814 = vpop.f32.mrb[0].mxu0
      %v815 = vadd.f32 %v344, %v814
      %v816 = vpop.f32.mrb[0].mxu0
      %v817 = vadd.f32 %v349, %v816
      %v818 = vpop.f32.mrb[0].mxu0
      %v819 = vadd.f32 %v349, %v818
      %820 = vmatprep.mubr.bf16.mxu0 %v399
      %821 = vmatmul.mubr.bf16.gmra.mrb[0].mxu0 %v398
      %v822 = vpop.f32.mrb[0].mxu0
      %v823 = vadd.f32 %v354, %v822
      %v824 = vpop.f32.mrb[0].mxu0
      %v825 = vadd.f32 %v354, %v824
      %v826 = vpop.f32.mrb[0].mxu0
      %v827 = vadd.f32 %v359, %v826
      %v828 = vpop.f32.mrb[0].mxu0
      %v829 = vadd.f32 %v359, %v828
      %830 = vdwg.mxu0
      %831 = vmatprep.subr.bf16.mxu0 %v660
      %832 = vmatpush1.bf16.msra.mxu0 %v659
      %833 = vmatprep.subr.bf16.mxu0 %v662
      %834 = vmatpush1.bf16.msra.mxu0 %v661
      %835 = vmatprep.subr.bf16.mxu0 %v664
      %836 = vmatpush1.bf16.msra.mxu0 %v663
      %837 = vmatprep.subr.bf16.mxu0 %v666
      %838 = vmatpush1.bf16.msra.mxu0 %v665
      %839 = vmatprep.subr.bf16.mxu0 %v668
      %840 = vmatpush1.bf16.msra.mxu0 %v667
      %841 = vmatprep.subr.bf16.mxu0 %v670
      %842 = vmatpush1.bf16.msra.mxu0 %v669
      %843 = vmatprep.subr.bf16.mxu0 %v672
      %844 = vmatpush1.bf16.msra.mxu0 %v671
      %845 = vmatprep.subr.bf16.mxu0 %v674
      %846 = vmatpush1.bf16.msra.mxu0 %v673
      %847 = vmatprep.subr.bf16.mxu0 %v676
      %848 = vmatpush1.bf16.msra.mxu0 %v675
      %849 = vmatprep.subr.bf16.mxu0 %v678
      %850 = vmatpush1.bf16.msra.mxu0 %v677
      %851 = vmatprep.subr.bf16.mxu0 %v680
      %852 = vmatpush1.bf16.msra.mxu0 %v679
      %853 = vmatprep.subr.bf16.mxu0 %v682
      %854 = vmatpush1.bf16.msra.mxu0 %v681
      %855 = vmatprep.subr.bf16.mxu0 %v684
      %856 = vmatpush1.bf16.msra.mxu0 %v683
      %857 = vmatprep.subr.bf16.mxu0 %v686
      %858 = vmatpush1.bf16.msra.mxu0 %v685
      %859 = vmatprep.subr.bf16.mxu0 %v688
      %860 = vmatpush1.bf16.msra.mxu0 %v687
      %861 = vmatprep.subr.bf16.mxu0 %v690
      %862 = vmatpush1.bf16.msra.mxu0 %v689
      %863 = vmatprep.mubr.bf16.mxu0 %v396
      %864 = vmatmul.mubr.bf16.gmra.mrb[0].mxu0 %v395
      %v865 = vpop.f32.mrb[0].mxu0
      %v866 = vadd.f32 %v813, %v865
      %v867 = vpop.f32.mrb[0].mxu0
      %v868 = vadd.f32 %v815, %v867
      %v869 = vpop.f32.mrb[0].mxu0
      %v870 = vadd.f32 %v817, %v869
      %v871 = vpop.f32.mrb[0].mxu0
      %v872 = vadd.f32 %v819, %v871
      %873 = vmatprep.mubr.bf16.mxu0 %v401
      %874 = vmatmul.mubr.bf16.gmra.mrb[0].mxu0 %v400
      %v875 = vpop.f32.mrb[0].mxu0
      %v876 = vadd.f32 %v823, %v875
      %v877 = vpop.f32.mrb[0].mxu0
      %v878 = vadd.f32 %v825, %v877
      %v879 = vpop.f32.mrb[0].mxu0
      %v880 = vadd.f32 %v827, %v879
      %v881 = vpop.f32.mrb[0].mxu0
      %v882 = vadd.f32 %v829, %v881
      %883 = vdwg.mxu0
      %884 = vmatprep.subr.bf16.mxu0 %v692
      %885 = vmatpush1.bf16.msra.mxu0 %v691
      %886 = vmatprep.subr.bf16.mxu0 %v694
      %887 = vmatpush1.bf16.msra.mxu0 %v693
      %888 = vmatprep.subr.bf16.mxu0 %v696
      %889 = vmatpush1.bf16.msra.mxu0 %v695
      %890 = vmatprep.subr.bf16.mxu0 %v698
      %891 = vmatpush1.bf16.msra.mxu0 %v697
      %892 = vmatprep.subr.bf16.mxu0 0
      %893 = vmatpush1.bf16.msra.mxu0 0
      %894 = vmatprep.subr.bf16.mxu0 0
      %895 = vmatpush1.bf16.msra.mxu0 0
      %896 = vmatprep.subr.bf16.mxu0 0
      %897 = vmatpush1.bf16.msra.mxu0 0
      %898 = vmatprep.subr.bf16.mxu0 0
      %899 = vmatpush1.bf16.msra.mxu0 0
      %900 = vmatprep.subr.bf16.mxu0 0
      %901 = vmatpush1.bf16.msra.mxu0 0
      %902 = vmatprep.subr.bf16.mxu0 0
      %903 = vmatpush1.bf16.msra.mxu0 0
      %904 = vmatprep.subr.bf16.mxu0 0
      %905 = vmatpush1.bf16.msra.mxu0 0
      %906 = vmatprep.subr.bf16.mxu0 0
      %907 = vmatpush1.bf16.msra.mxu0 0
      %908 = vmatprep.subr.bf16.mxu0 0
      %909 = vmatpush1.bf16.msra.mxu0 0
      %910 = vmatprep.subr.bf16.mxu0 0
      %911 = vmatpush1.bf16.msra.mxu0 0
      %912 = vmatprep.subr.bf16.mxu0 0
      %913 = vmatpush1.bf16.msra.mxu0 0
      %914 = vmatprep.subr.bf16.mxu0 0
      %915 = vmatpush1.bf16.msra.mxu0 0
      %916 = vmatprep.mubr.bf16.mxu0 0
      %917 = vmatmul.mubr.bf16.gmra.mrb[0].mxu0 %v773
      %v918 = vpop.f32.mrb[0].mxu0
      %v919 = vadd.f32 %v866, %v918
      %v920 = vpop.f32.mrb[0].mxu0
      %v921 = vadd.f32 %v868, %v920
      %v922 = vpop.f32.mrb[0].mxu0
      %v923 = vadd.f32 %v870, %v922
      %v924 = vpop.f32.mrb[0].mxu0
      %v925 = vadd.f32 %v872, %v924
      %926 = vmatprep.mubr.bf16.mxu0 0
      %927 = vmatmul.mubr.bf16.gmra.mrb[0].mxu0 %v776
      %v928 = vpop.f32.mrb[0].mxu0
      %v929 = vadd.f32 %v876, %v928
      %v930 = vpop.f32.mrb[0].mxu0
      %v931 = vadd.f32 %v878, %v930
      %v932 = vpop.f32.mrb[0].mxu0
      %v933 = vadd.f32 %v880, %v932
      %v934 = vpop.f32.mrb[0].mxu0
      %v935 = vadd.f32 %v882, %v934
      %936 = vdwg.mxu0
      %v937 = vadd.f32 %v919, %v921
      %938 = vadd.xlane.f32.xlu0 %v937
      %v939 = vpop.xlane.xlu0 %938
      %v940 = vadd.f32 %v923, %v925
      %941 = vadd.xlane.f32.xlu0 %v940
      %v942 = vpop.xlane.xlu0 %941
      %v943 = vadd.f32 %v929, %v931
      %944 = vadd.xlane.f32.xlu0 %v943
      %v945 = vpop.xlane.xlu0 %944
      %v946 = vadd.f32 %v933, %v935
      %947 = vadd.xlane.f32.xlu0 %v946
      %v948 = vpop.xlane.xlu0 %947
      %v949 = vmul.f32 %v919, %v919
      %v950 = vmul.f32 %v921, %v921
      %v951 = vmul.f32 %v923, %v923
      %v952 = vmul.f32 %v925, %v925
      %v953 = vmul.f32 %v929, %v929
      %v954 = vmul.f32 %v931, %v931
      %v955 = vmul.f32 %v933, %v933
      %v956 = vmul.f32 %v935, %v935
      %v957 = vadd.f32 %v949, %v950
      %958 = vadd.xlane.f32.xlu0 %v957
      %v959 = vpop.xlane.xlu0 %958
      %v960 = vadd.f32 %v951, %v952
      %961 = vadd.xlane.f32.xlu0 %v960
      %v962 = vpop.xlane.xlu0 %961
      %v963 = vadd.f32 %v953, %v954
      %964 = vadd.xlane.f32.xlu0 %v963
      %v965 = vpop.xlane.xlu0 %964
      %v966 = vadd.f32 %v955, %v956
      %967 = vadd.xlane.f32.xlu0 %v966
      %v968 = vpop.xlane.xlu0 %967
      %vm969 = vcmask 7168
      %v970 = vsel %vm969, %v939, %v959
      %v971 = vsel %vm969, %v942, %v962
      %v972 = vsel %vm969, %v945, %v965
      %v973 = vsel %vm969, %v948, %v968
      %v974 = vld [vmem:[%s5] sm:$0xff]
      %v975 = vld [vmem:[%s5 + $0x8] sm:$0xff]
      %v976 = vld [vmem:[%s5 + $0x10] sm:$0xff]
      %v977 = vld [vmem:[%s5 + $0x18] sm:$0xff]
      %vm978 = vcmask 261120
      %v980 = vsel %vm978, %v974, 0
      %v983 = vsel %vm978, %v975, 0
      %v986 = vsel %vm978, %v976, 0
      %v989 = vsel %vm978, %v977, 0
      %991 = vmatprep.subr.mxu0 0.0
      %992 = vmatpush1.msra.mxu0 %v970
      %993 = vmatprep.subr.mxu0 0.0
      %994 = vmatpush1.msra.mxu0 %v971
      %995 = vmatprep.subr.mxu0 0.0
      %996 = vmatpush1.msra.mxu0 %v972
      %997 = vmatprep.subr.mxu0 0.0
      %998 = vmatpush1.msra.mxu0 %v973
      %999 = vmatprep.subr.mxu0 0.0
      %1000 = vmatpush1.msra.mxu0 0.0
      %1001 = vmatprep.subr.mxu0 0.0
      %1002 = vmatpush1.msra.mxu0 0.0
      %1003 = vmatprep.subr.mxu0 0.0
      %1004 = vmatpush1.msra.mxu0 0.0
      %1005 = vmatprep.subr.mxu0 0.0
      %1006 = vmatpush1.msra.mxu0 0.0
      %1007 = vmatprep.subr.mxu0 0.0
      %1008 = vmatpush1.msra.mxu0 0.0
      %1009 = vmatprep.subr.mxu0 0.0
      %1010 = vmatpush1.msra.mxu0 0.0
      %1011 = vmatprep.subr.mxu0 0.0
      %1012 = vmatpush1.msra.mxu0 0.0
      %1013 = vmatprep.subr.mxu0 0.0
      %1014 = vmatpush1.msra.mxu0 0.0
      %1015 = vmatprep.subr.mxu0 0.0
      %1016 = vmatpush1.msra.mxu0 0.0
      %1017 = vmatprep.subr.mxu0 0.0
      %1018 = vmatpush1.msra.mxu0 0.0
      %1019 = vmatprep.subr.mxu0 0.0
      %1020 = vmatpush1.msra.mxu0 0.0
      %1021 = vmatprep.subr.mxu0 0.0
      %1022 = vmatpush1.msra.mxu0 0.0
      %1023 = vmatprep.subr.mxu0 0.0
      %1024 = vmatpush1.msra.mxu0 0.0
      %1025 = vmatprep.subr.mxu0 0.0
      %1026 = vmatpush1.msra.mxu0 0.0
      %1027 = vmatprep.subr.mxu0 0.0
      %1028 = vmatpush1.msra.mxu0 0.0
      %1029 = vmatprep.subr.mxu0 0.0
      %1030 = vmatpush1.msra.mxu0 0.0
      %1031 = vmatprep.subr.mxu0 0.0
      %1032 = vmatpush1.msra.mxu0 0.0
      %1033 = vmatprep.subr.mxu0 0.0
      %1034 = vmatpush1.msra.mxu0 0.0
      %1035 = vmatprep.subr.mxu0 0.0
      %1036 = vmatpush1.msra.mxu0 0.0
      %1037 = vmatprep.subr.mxu0 0.0
      %1038 = vmatpush1.msra.mxu0 0.0
      %1039 = vmatprep.subr.mxu0 0.0
      %1040 = vmatpush1.msra.mxu0 0.0
      %1041 = vmatprep.subr.mxu0 0.0
      %1042 = vmatpush1.msra.mxu0 0.0
      %1043 = vmatprep.subr.mxu0 0.0
      %1044 = vmatpush1.msra.mxu0 0.0
      %1045 = vmatprep.subr.mxu0 0.0
      %1046 = vmatpush1.msra.mxu0 0.0
      %1047 = vmatprep.subr.mxu0 0.0
      %1048 = vmatpush1.msra.mxu0 0.0
      %1049 = vmatprep.subr.mxu0 0.0
      %1050 = vmatpush1.msra.mxu0 0.0
      %1051 = vmatprep.subr.mxu0 0.0
      %1052 = vmatpush1.msra.mxu0 0.0
      %1053 = vmatprep.subr.mxu0 0.0
      %1054 = vmatpush1.msra.mxu0 0.0
      %1055 = vmatprep.mubr.f32.mxu0 0.0
      %1056 = vmatmul.mubr.f32.gmra.mrb[0].mxu0 %v980
      %v1057 = vpop.f32.mrb[0].mxu0
      %v1058 = vadd.f32 0.0, %v1057
      %v1059 = vpop.f32.mrb[0].mxu0
      %1060 = vmatprep.mubr.f32.mxu0 0.0
      %1061 = vmatmul.mubr.f32.gmra.mrb[0].mxu0 %v983
      %v1062 = vpop.f32.mrb[0].mxu0
      %v1063 = vadd.f32 0.0, %v1062
      %v1064 = vpop.f32.mrb[0].mxu0
      %1065 = vmatprep.mubr.f32.mxu0 0.0
      %1066 = vmatmul.mubr.f32.gmra.mrb[0].mxu0 %v986
      %v1067 = vpop.f32.mrb[0].mxu0
      %v1068 = vadd.f32 0.0, %v1067
      %v1069 = vpop.f32.mrb[0].mxu0
      %1070 = vmatprep.mubr.f32.mxu0 0.0
      %1071 = vmatmul.mubr.f32.gmra.mrb[0].mxu0 %v989
      %v1072 = vpop.f32.mrb[0].mxu0
      %v1073 = vadd.f32 0.0, %v1072
      %v1074 = vpop.f32.mrb[0].mxu0
      %1075 = vdwg.mxu0
      %v1076 = vmul.f32 %v1058, 0.001953125
      %v1077 = vmul.f32 %v1063, 0.001953125
      %v1078 = vmul.f32 %v1068, 0.001953125
      %v1079 = vmul.f32 %v1073, 0.001953125
      %v1080 = vmul.f32 %v1076, %v1076
      %v1081 = vmul.f32 %v1077, %v1077
      %v1082 = vmul.f32 %v1078, %v1078
      %v1083 = vmul.f32 %v1079, %v1079
      %1088 = vrot.lane.b32.xlu0 %v1080, 1
      %v1089 = vpop.permute.xlu0 %1088
      %1090 = vrot.lane.b32.xlu0 %v1081, 1
      %v1091 = vpop.permute.xlu0 %1090
      %1092 = vrot.lane.b32.xlu0 %v1082, 1
      %v1093 = vpop.permute.xlu0 %1092
      %1094 = vrot.lane.b32.xlu0 %v1083, 1
      %v1095 = vpop.permute.xlu0 %1094
      %v1100 = vsub.f32 %v1076, %v1089
      %v1101 = vsub.f32 %v1077, %v1091
      %v1102 = vsub.f32 %v1078, %v1093
      %v1103 = vsub.f32 %v1079, %v1095
      %v1104 = vmax.f32 %v1100, 0.0
      %v1105 = vmax.f32 %v1101, 0.0
      %v1106 = vmax.f32 %v1102, 0.0
      %v1107 = vmax.f32 %v1103, 0.0
      %v1108 = vadd.f32 %v1104, 1e-05
      %v1109 = vadd.f32 %v1105, 1e-05
      %v1110 = vadd.f32 %v1106, 1e-05
      %v1111 = vadd.f32 %v1107, 1e-05
      %v1112 = vrsqrt.pop %v1108
      %v1113 = vrsqrt.pop %v1109
      %v1114 = vrsqrt.pop %v1110
      %v1115 = vrsqrt.pop %v1111
      %v1116 = vld [vmem:[%s3] sm:$0xff]
      %v1117 = vld [vmem:[%s3 + $0x8] sm:$0xff]
      %v1118 = vld [vmem:[%s3 + $0x10] sm:$0xff]
      %v1119 = vld [vmem:[%s3 + $0x18] sm:$0xff]
      %1124 = vrot.lane.b32.xlu0 %v1112, 127
      %v1125 = vpop.permute.xlu0 %1124
      %1126 = vrot.lane.b32.xlu0 %v1113, 127
      %v1127 = vpop.permute.xlu0 %1126
      %1128 = vrot.lane.b32.xlu0 %v1114, 127
      %v1129 = vpop.permute.xlu0 %1128
      %1130 = vrot.lane.b32.xlu0 %v1115, 127
      %v1131 = vpop.permute.xlu0 %1130
      %v1136 = vmul.f32 %v1116, %v1125
      %v1137 = vmul.f32 %v1117, %v1127
      %v1138 = vmul.f32 %v1118, %v1129
      %v1139 = vmul.f32 %v1119, %v1131
      %v1140 = vld [vmem:[%s4] sm:$0xff]
      %v1141 = vld [vmem:[%s4 + $0x8] sm:$0xff]
      %v1142 = vld [vmem:[%s4 + $0x10] sm:$0xff]
      %v1143 = vld [vmem:[%s4 + $0x18] sm:$0xff]
      %v1144 = vmul.f32 %v1076, %v1136
      %v1145 = vmul.f32 %v1077, %v1137
      %v1146 = vmul.f32 %v1078, %v1138
      %v1147 = vmul.f32 %v1079, %v1139
      %v1148 = vsub.f32 %v1140, %v1144
      %v1149 = vsub.f32 %v1141, %v1145
      %v1150 = vsub.f32 %v1142, %v1146
      %v1151 = vsub.f32 %v1143, %v1147
      %1153 = vset.pattern.permute.xlu0 0
      %1154 = vperm.xlu0 %1153, %v1136
      %v1155 = vpop.permute.xlu0 %1154
      %1158 = vset.pattern.permute.xlu0 0
      %1159 = vperm.xlu0 %1158, %v1137
      %v1160 = vpop.permute.xlu0 %1159
      %1163 = vset.pattern.permute.xlu0 0
      %1164 = vperm.xlu0 %1163, %v1138
      %v1165 = vpop.permute.xlu0 %1164
      %1168 = vset.pattern.permute.xlu0 0
      %1169 = vperm.xlu0 %1168, %v1139
      %v1170 = vpop.permute.xlu0 %1169
      %v1172 = vmul.f32 %v919, %v1155
      %v1173 = vmul.f32 %v921, %v1155
      %v1174 = vmul.f32 %v923, %v1160
      %v1175 = vmul.f32 %v925, %v1160
      %v1176 = vmul.f32 %v929, %v1165
      %v1177 = vmul.f32 %v931, %v1165
      %v1178 = vmul.f32 %v933, %v1170
      %v1179 = vmul.f32 %v935, %v1170
      %1181 = vset.pattern.permute.xlu0 0
      %1182 = vperm.xlu0 %1181, %v1148
      %v1183 = vpop.permute.xlu0 %1182
      %1186 = vset.pattern.permute.xlu0 0
      %1187 = vperm.xlu0 %1186, %v1149
      %v1188 = vpop.permute.xlu0 %1187
      %1191 = vset.pattern.permute.xlu0 0
      %1192 = vperm.xlu0 %1191, %v1150
      %v1193 = vpop.permute.xlu0 %1192
      %1196 = vset.pattern.permute.xlu0 0
      %1197 = vperm.xlu0 %1196, %v1151
      %v1198 = vpop.permute.xlu0 %1197
      %v1200 = vadd.f32 %v1172, %v1183
      %v1201 = vadd.f32 %v1173, %v1183
      %v1202 = vadd.f32 %v1174, %v1188
      %v1203 = vadd.f32 %v1175, %v1188
      %v1204 = vadd.f32 %v1176, %v1193
      %v1205 = vadd.f32 %v1177, %v1193
      %v1206 = vadd.f32 %v1178, %v1198
      %v1207 = vadd.f32 %v1179, %v1198
      %v1208 = vmul.f32 %v1200, 0.2
      %v1209 = vmul.f32 %v1201, 0.2
      %v1210 = vmul.f32 %v1202, 0.2
      %v1211 = vmul.f32 %v1203, 0.2
      %v1212 = vmul.f32 %v1204, 0.2
      %v1213 = vmul.f32 %v1205, 0.2
      %v1214 = vmul.f32 %v1206, 0.2
      %v1215 = vmul.f32 %v1207, 0.2
      %v1216 = vmax.f32 %v1200, %v1208
      %v1217 = vmax.f32 %v1201, %v1209
      %v1218 = vmax.f32 %v1202, %v1210
      %v1219 = vmax.f32 %v1203, %v1211
      %v1220 = vmax.f32 %v1204, %v1212
      %v1221 = vmax.f32 %v1205, %v1213
      %v1222 = vmax.f32 %v1206, %v1214
      %v1223 = vmax.f32 %v1207, %v1215
      %1224 = vst [vmem:[%s251] sm:$0xff] %v1216
      %1225 = vst [vmem:[%s251 + $0x8] sm:$0xff] %v1217
      %1226 = vst [vmem:[%s251 + $0x10] sm:$0xff] %v1218
      %1227 = vst [vmem:[%s251 + $0x18] sm:$0xff] %v1219
      %1228 = vst [vmem:[%s251 + $0x20] sm:$0xff] %v1220
      %1229 = vst [vmem:[%s251 + $0x28] sm:$0xff] %v1221
      %1230 = vst [vmem:[%s251 + $0x30] sm:$0xff] %v1222
      %1231 = vst [vmem:[%s251 + $0x38] sm:$0xff] %v1223
      %p1232 = scmp.lt.s32.totalorder %s17, 1
      %s1233 = scalar_select %p1232, %s17, 1
      %s1234 = smul.addr %s1233, 8
      %s1235 = smul.addr %s1234, 8
      %s1236 = scalar_lea.vmem %s6, %s1235
      // Predicated region
      $region45: #{dcgan_upconv_forward.1} parent=43 // pred_check
        %p1237 = pneg %p166
      $region46: #{dcgan_upconv_forward.1} parent=43 // pred_check_branch
        %1239 = sbr.rel (%p1237) target = $region48
      $region47: #{dcgan_upconv_forward.1} parent=43 // pred_region
        _
      $region48: #{dcgan_upconv_forward.1} parent=43 // pred_fallthru
        _
    $region44: #{dcgan_upconv_forward.1} parent=5 // pred_fallthru
      _
    %p1240 = scmp.le.s32.totalorder 2, %s12
    // Predicated region
    $region49: #{dcgan_upconv_forward.1} parent=5 // pred_check
      %p1241 = pneg %p1240
    $region50: #{dcgan_upconv_forward.1} parent=5 // pred_check_branch
      %1243 = sbr.rel (%p1241) target = $region52
    $region51: #{dcgan_upconv_forward.1} parent=5 // pred_region
      %s1244 = ssub.s32 %s12, 2
      // Predicated region
      $region53: #{dcgan_upconv_forward.1} parent=51 // pred_check
        %p1245 = pneg %p172
      $region54: #{dcgan_upconv_forward.1} parent=51 // pred_check_branch
        %1247 = sbr.rel (%p1245) target = $region56
      $region55: #{dcgan_upconv_forward.1} parent=51 // pred_region
        %p1248 = scmp.lt.s32.totalorder %s18, 1
        %s1249 = scalar_select %p1248, %s18, 1
        %s1250 = smul.addr %s1249, 8
        %s1251 = smul.addr %s1250, 8
        %s1252 = scalar_lea.vmem %s6, %s1251
      $region56: #{dcgan_upconv_forward.1} parent=51 // pred_fallthru
        _
    $region52: #{dcgan_upconv_forward.1} parent=5 // pred_fallthru
      _
  $region6: #{dcgan_upconv_forward.1} parent=0 // loop_footer
    %s16 = sadd.s32 1, %s12
  $region7: #{dcgan_upconv_forward.1} parent=0 // loop_footer_branch
    %11 = sbr.rel target = $region3
  $region8: #{dcgan_upconv_forward.1} parent=0 // loop_exit
    _

</llo_original>
